<compile_context>
chip_gen: v6e
topology: v6e:2x2x1
jax: 0.10.0
libtpu: 0.0.40
codegen_flags: <defaults>
</compile_context>

<pallas_src>
import jax
import jax.numpy as jnp
from jax import lax
from jax.experimental import pallas as pl
from jax.experimental.pallas import tpu as pltpu

_LANE = 512          # lane dimension of the 2D slab (multiple of 128)
_TM_MAX = 1024       # max rows per tile (<= 2 MiB f32 per input block)
_ROW_ALIGN = 32      # tm is a multiple of this (covers f32/bf16/int8 packing)
_NUM_PARTS = 2       # independent partial-sum streams (megacore-friendly)
_EPS = 1e-6


def _cdiv(a, b):
    return -(-a // b)


def _round_up(a, b):
    return _cdiv(a, b) * b


def _plan(total):
    """Choose (tm, parts, tiles_per_part, rows_kernel); None -> all-epilogue."""
    rows = total // _LANE
    units = rows // _ROW_ALIGN
    if units == 0:
        return None                                # tiny input: pure-JAX path
    max_upt = _TM_MAX // _ROW_ALIGN
    parts = _NUM_PARTS if units >= _NUM_PARTS else 1
    n_tiles = _round_up(max(parts, _cdiv(units, max_upt)), parts)
    if n_tiles > units:                            # defensive (shouldn't trigger)
        parts = 1
        n_tiles = min(units, _cdiv(units, max_upt))
    upt = units // n_tiles                         # >= 1, <= max_upt
    tm = upt * _ROW_ALIGN
    rows_kernel = n_tiles * tm
    return tm, parts, n_tiles // parts, rows_kernel


def _strip_rows(*arrays):
    """Strip height = max packed-dtype sublane multiple among the inputs."""
    s = 8
    for a in arrays:
        s = max(s, 32 // max(1, a.dtype.itemsize))
    return s


def _make_kernel(n_strips, strip_rows, masked):
    """Fused streaming-reduction kernel over one (tm, _LANE) tile."""
    sub = strip_rows // 8
    unroll = min(4, n_strips)

    def kernel(*refs):
        if masked:
            pred_ref, target_ref, mask_ref, sq_ref, lin_ref, cnt_ref = refs
        else:
            pred_ref, target_ref, sq_ref, lin_ref = refs
            mask_ref = cnt_ref = None

        @pl.when(pl.program_id(1) == 0)
        def _init():
            sq_ref[...] = jnp.zeros_like(sq_ref)
            lin_ref[...] = jnp.zeros_like(lin_ref)
            if masked:
                cnt_ref[...] = jnp.zeros_like(cnt_ref)

        zero = jnp.zeros((8, _LANE), jnp.float32)

        def body(s, carry):
            if masked:
                sq, lin, cnt = carry
            else:
                sq, lin = carry
                cnt = None
            r0 = pl.multiple_of(s * strip_rows, strip_rows)
            p_s = pred_ref[pl.ds(r0, strip_rows), :].astype(jnp.float32)
            t_s = target_ref[pl.ds(r0, strip_rows), :].astype(jnp.float32)
            if masked:
                m_s = mask_ref[pl.ds(r0, strip_rows), :].astype(jnp.float32)
            for k in range(sub):                       # static vreg-aligned sub-slices
                rs = slice(k * 8, (k + 1) * 8)
                p = p_s[rs, :]
                t = t_s[rs, :]
                if masked:
                    m = m_s[rs, :]
                    d = jnp.log((p * m + _EPS) / (t * m + _EPS))   # one log, not two
                    dm = d * m
                    sq = sq + d * dm
                    lin = lin + dm
                    cnt = cnt + (m > 0.5).astype(jnp.float32)
                else:
                    d = jnp.log((p + _EPS) / (t + _EPS))
                    sq = sq + d * d
                    lin = lin + d
            return (sq, lin, cnt) if masked else (sq, lin)

        init = (zero, zero, zero) if masked else (zero, zero)
        accs = lax.fori_loop(0, n_strips, body, init, unroll=unroll)

        sq_ref[...] += accs[0]
        lin_ref[...] += accs[1]
        if masked:
            cnt_ref[...] += accs[2]

    return kernel


def _partial_sums(pred, target, mask):
    """Pure-JAX partial sums over a (small) remainder chunk."""
    p = pred.astype(jnp.float32)
    t = target.astype(jnp.float32)
    if mask is None:
        d = jnp.log((p + _EPS) / (t + _EPS))
        return jnp.sum(d * d), jnp.sum(d)
    m = mask.astype(jnp.float32)
    d = jnp.log((p * m + _EPS) / (t * m + _EPS))
    dm = d * m
    return jnp.sum(d * dm), jnp.sum(dm), jnp.sum((m > 0.5).astype(jnp.float32))


def scale_invariant_loss(pred, target, mask=None, alpha=10.0):
    """Scale-invariant depth loss; pred/target/(mask) may be any shape (e.g. NCHW)."""
    if pred.dtype.itemsize > 4:
        pred = pred.astype(jnp.float32)
    if target.dtype.itemsize > 4:
        target = target.astype(jnp.float32)
    if mask is not None:
        if not jnp.issubdtype(mask.dtype, jnp.floating):
            mask = mask.astype(jnp.bfloat16)      # narrow, exact for 0/1 masks
        elif mask.dtype.itemsize > 4:
            mask = mask.astype(jnp.float32)

    total = pred.size
    pred_f = pred.reshape(-1)
    target_f = target.reshape(-1)
    mask_f = mask.reshape(-1) if mask is not None else None

    sq = jnp.float32(0.0)
    lin = jnp.float32(0.0)
    cnt = jnp.float32(0.0) if mask is not None else None

    plan = _plan(total)
    bulk = 0
    if plan is not None:
        tm, parts, tiles_per_part, rows_kernel = plan
        bulk = rows_kernel * _LANE

        def slab(x):
            xb = x if x.shape[0] == bulk else lax.slice(x, (0,), (bulk,))
            return xb.reshape(rows_kernel, _LANE)    # free reshape when aligned

        inputs = (pred_f, target_f) if mask is None else (pred_f, target_f, mask_f)
        strip = _strip_rows(*inputs)
        n_strips = tm // strip

        grid = (parts, tiles_per_part)
        in_block = pl.BlockSpec((tm, _LANE), lambda p, i: (p * tiles_per_part + i, 0))
        out_block = pl.BlockSpec((8, _LANE), lambda p, i: (p, 0))
        acc_shape = jax.ShapeDtypeStruct((parts * 8, _LANE), jnp.float32)
        n_out = 3 if mask is not None else 2

        cost = pl.CostEstimate(
            flops=(12 if mask is not None else 8) * bulk,
            transcendentals=bulk,
            bytes_accessed=sum(x.dtype.itemsize for x in inputs) * bulk
            + n_out * parts * 8 * _LANE * 4,
        )
        cparams = pltpu.CompilerParams(
            dimension_semantics=("parallel", "arbitrary"),
            vmem_limit_bytes=32 * 1024 * 1024,
        )

        outs = pl.pallas_call(
            _make_kernel(n_strips, strip, masked=mask is not None),
            grid=grid,
            in_specs=[in_block] * len(inputs),
            out_specs=(out_block,) * n_out,
            out_shape=(acc_shape,) * n_out,
            compiler_params=cparams,
            cost_estimate=cost,
        )(*[slab(x) for x in inputs])

        sq = sq + jnp.sum(outs[0])
        lin = lin + jnp.sum(outs[1])
        if mask is not None:
            cnt = cnt + jnp.sum(outs[2])

    if bulk < total:
        # Pure-JAX remainder (< ~1% of elements + sub-4K lane tail).
        pr = lax.slice(pred_f, (bulk,), (total,))
        tr = lax.slice(target_f, (bulk,), (total,))
        if mask is None:
            rsq, rlin = _partial_sums(pr, tr, None)
        else:
            mr = lax.slice(mask_f, (bulk,), (total,))
            rsq, rlin, rcnt = _partial_sums(pr, tr, mr)
            cnt = cnt + rcnt
        sq = sq + rsq
        lin = lin + rlin

    if mask is None:
        valid = jnp.float32(total) + 1e-8        # mask-free fast path: static count
    else:
        valid = cnt + 1e-8

    mean_term = sq / valid
    variance_term = (lin / valid) ** 2
    return mean_term - alpha * variance_term


def _reference_loss(pred, target, mask=None, alpha=10.0):
    """Pure-JAX reference matching the PyTorch ScaleInvariantLoss semantics."""
    if mask is None:
        mask = jnp.ones_like(target)
    p = pred * mask
    t = target * mask
    d = jnp.log(p + 1e-6) - jnp.log(t + 1e-6)
    valid = jnp.sum((mask > 0.5).astype(jnp.float32)) + 1e-8
    mean_term = jnp.sum(d * d * mask) / valid
    variance_term = (jnp.sum(d * mask) / valid) ** 2
    return mean_term - alpha * variance_term


if __name__ == "__main__":
    key = jax.random.PRNGKey(0)
    k1, k2, k3, k4, k5, k6 = jax.random.split(key, 6)

    # Case 1: aligned depth maps (whole array handled by the kernel, f32 mask).
    N, C, H, W = 2, 1, 128, 128
    pred = jax.random.uniform(k1, (N, C, H, W), jnp.float32, 0.1, 10.0)
    target = jax.random.uniform(k2, (N, C, H, W), jnp.float32, 0.1, 10.0)
    mask = (jax.random.uniform(k3, (N, C, H, W)) > 0.3).astype(jnp.float32)

    loss_masked = scale_invariant_loss(pred, target, mask, alpha=10.0)
    loss_nomask = scale_invariant_loss(pred, target, None, alpha=10.0)

    # Case 2: non-aligned shape + bool mask (kernel bulk + pure-JAX remainder,
    # narrow bf16 mask slab, 16-row strips).
    H2, W2 = 120, 120
    pred2 = jax.random.uniform(k4, (N, C, H2, W2), jnp.float32, 0.1, 10.0)
    target2 = jax.random.uniform(k5, (N, C, H2, W2), jnp.float32, 0.1, 10.0)
    mask2 = jax.random.uniform(k6, (N, C, H2, W2)) > 0.3   # bool mask

    loss_masked2 = scale_invariant_loss(pred2, target2, mask2, alpha=10.0)

    jax.block_until_ready((loss_masked, loss_nomask, loss_masked2))

    ref_masked = _reference_loss(pred, target, mask, alpha=10.0)
    ref_nomask = _reference_loss(pred, target, None, alpha=10.0)
    ref_masked2 = _reference_loss(pred2, target2, mask2.astype(jnp.float32), alpha=10.0)

    assert jnp.allclose(loss_masked, ref_masked, rtol=1e-4, atol=1e-4), (loss_masked, ref_masked)
    assert jnp.allclose(loss_nomask, ref_nomask, rtol=1e-4, atol=1e-4), (loss_nomask, ref_nomask)
    assert jnp.allclose(loss_masked2, ref_masked2, rtol=1e-4, atol=1e-4), (loss_masked2, ref_masked2)

    print("KERNEL_OK")
</pallas_src>

<mosaic_0001>
module attributes {stable_mosaic.version = 11 : i64} {
  func.func @kernel(%arg0: i32, %arg1: i32, %arg2: memref<32x512xf32, #tpu.memory_space<vmem>>, %arg3: memref<32x512xf32, #tpu.memory_space<vmem>>, %arg4: memref<32x512xf32, #tpu.memory_space<vmem>>, %arg5: memref<8x512xf32, #tpu.memory_space<vmem>>, %arg6: memref<8x512xf32, #tpu.memory_space<vmem>>, %arg7: memref<8x512xf32, #tpu.memory_space<vmem>>) attributes {dimension_semantics = [#tpu.dimension_semantics<parallel>, #tpu.dimension_semantics<arbitrary>], iteration_bounds = array<i64: 2, 1>, scalar_prefetch = 0 : i64, scratch_operands = 0 : i64, tpu.core_type = #tpu.core_type<tc>, window_params = [{transform_indices = @transform_0, window_bounds = array<i64: 32, 512>}, {transform_indices = @transform_1, window_bounds = array<i64: 32, 512>}, {transform_indices = @transform_2, window_bounds = array<i64: 32, 512>}, {transform_indices = @transform_3, window_bounds = array<i64: 8, 512>}, {transform_indices = @transform_4, window_bounds = array<i64: 8, 512>}, {transform_indices = @transform_5, window_bounds = array<i64: 8, 512>}]} {
    %c0_i32 = arith.constant 0 : i32
    %0 = arith.cmpi eq, %arg1, %c0_i32 : i32
    %1 = arith.extui %0 : i1 to i32
    %c0_i32_0 = arith.constant 0 : i32
    %2 = arith.cmpi ne, %1, %c0_i32_0 : i32
    scf.if %2 {
      %cst_40 = arith.constant 0.000000e+00 : f32
      %113 = vector.broadcast %cst_40 : f32 to vector<8x512xf32>
      %c0_41 = arith.constant 0 : index
      %c0_42 = arith.constant 0 : index
      %114 = vector.load %arg5[%c0_41, %c0_42] : memref<8x512xf32, #tpu.memory_space<vmem>>, vector<8x512xf32>
      tpu.vector_store %arg5[%c0_41, %c0_42], %113 {strides = array<i32>} : memref<8x512xf32, #tpu.memory_space<vmem>>, vector<8x512xf32>,
      %cst_43 = arith.constant 0.000000e+00 : f32
      %115 = vector.broadcast %cst_43 : f32 to vector<8x512xf32>
      %c0_44 = arith.constant 0 : index
      %c0_45 = arith.constant 0 : index
      %116 = vector.load %arg6[%c0_44, %c0_45] : memref<8x512xf32, #tpu.memory_space<vmem>>, vector<8x512xf32>
      tpu.vector_store %arg6[%c0_44, %c0_45], %115 {strides = array<i32>} : memref<8x512xf32, #tpu.memory_space<vmem>>, vector<8x512xf32>,
      %cst_46 = arith.constant 0.000000e+00 : f32
      %117 = vector.broadcast %cst_46 : f32 to vector<8x512xf32>
      %c0_47 = arith.constant 0 : index
      %c0_48 = arith.constant 0 : index
      %118 = vector.load %arg7[%c0_47, %c0_48] : memref<8x512xf32, #tpu.memory_space<vmem>>, vector<8x512xf32>
      tpu.vector_store %arg7[%c0_47, %c0_48], %117 {strides = array<i32>} : memref<8x512xf32, #tpu.memory_space<vmem>>, vector<8x512xf32>,
    } else {
    }
    %cst = arith.constant 0.000000e+00 : f32
    %3 = vector.broadcast %cst : f32 to vector<8x512xf32>
    %c0_i32_1 = arith.constant 0 : i32
    %c8_i32 = arith.constant 8 : i32
    %4 = arith.muli %c0_i32_1, %c8_i32 : i32
    %5 = tpu.assume_multiple %4, 8 : i32
    %6 = arith.index_cast %5 : i32 to index
    %c0 = arith.constant 0 : index
    %7 = vector.load %arg2[%6, %c0] : memref<32x512xf32, #tpu.memory_space<vmem>>, vector<8x512xf32>
    %8 = arith.index_cast %5 : i32 to index
    %c0_2 = arith.constant 0 : index
    %9 = vector.load %arg3[%8, %c0_2] : memref<32x512xf32, #tpu.memory_space<vmem>>, vector<8x512xf32>
    %10 = arith.index_cast %5 : i32 to index
    %c0_3 = arith.constant 0 : index
    %11 = vector.load %arg4[%10, %c0_3] : memref<32x512xf32, #tpu.memory_space<vmem>>, vector<8x512xf32>
    %12 = arith.mulf %7, %11 : vector<8x512xf32>
    %cst_4 = arith.constant 9.99999997E-7 : f32
    %13 = vector.broadcast %cst_4 : f32 to vector<8x512xf32>
    %14 = arith.addf %12, %13 : vector<8x512xf32>
    %15 = arith.mulf %9, %11 : vector<8x512xf32>
    %cst_5 = arith.constant 9.99999997E-7 : f32
    %16 = vector.broadcast %cst_5 : f32 to vector<8x512xf32>
    %17 = arith.addf %15, %16 : vector<8x512xf32>
    %18 = arith.divf %14, %17 : vector<8x512xf32>
    %19 = math.log %18 : vector<8x512xf32>
    %20 = arith.mulf %19, %11 : vector<8x512xf32>
    %21 = arith.mulf %19, %20 : vector<8x512xf32>
    %22 = arith.addf %3, %21 : vector<8x512xf32>
    %23 = arith.addf %3, %20 : vector<8x512xf32>
    %cst_6 = arith.constant 5.000000e-01 : f32
    %24 = vector.broadcast %cst_6 : f32 to vector<8x512xf32>
    %25 = arith.cmpf ogt, %11, %24 : vector<8x512xf32>
    %26 = arith.extui %25 : vector<8x512xi1> to vector<8x512xi32>
    %27 = arith.sitofp %26 : vector<8x512xi32> to vector<8x512xf32>
    %28 = arith.addf %3, %27 : vector<8x512xf32>
    %c1_i32 = arith.constant 1 : i32
    %c8_i32_7 = arith.constant 8 : i32
    %29 = arith.muli %c1_i32, %c8_i32_7 : i32
    %30 = tpu.assume_multiple %29, 8 : i32
    %31 = arith.index_cast %30 : i32 to index
    %c0_8 = arith.constant 0 : index
    %32 = vector.load %arg2[%31, %c0_8] : memref<32x512xf32, #tpu.memory_space<vmem>>, vector<8x512xf32>
    %33 = arith.index_cast %30 : i32 to index
    %c0_9 = arith.constant 0 : index
    %34 = vector.load %arg3[%33, %c0_9] : memref<32x512xf32, #tpu.memory_space<vmem>>, vector<8x512xf32>
    %35 = arith.index_cast %30 : i32 to index
    %c0_10 = arith.constant 0 : index
    %36 = vector.load %arg4[%35, %c0_10] : memref<32x512xf32, #tpu.memory_space<vmem>>, vector<8x512xf32>
    %37 = arith.mulf %32, %36 : vector<8x512xf32>
    %cst_11 = arith.constant 9.99999997E-7 : f32
    %38 = vector.broadcast %cst_11 : f32 to vector<8x512xf32>
    %39 = arith.addf %37, %38 : vector<8x512xf32>
    %40 = arith.mulf %34, %36 : vector<8x512xf32>
    %cst_12 = arith.constant 9.99999997E-7 : f32
    %41 = vector.broadcast %cst_12 : f32 to vector<8x512xf32>
    %42 = arith.addf %40, %41 : vector<8x512xf32>
    %43 = arith.divf %39, %42 : vector<8x512xf32>
    %44 = math.log %43 : vector<8x512xf32>
    %45 = arith.mulf %44, %36 : vector<8x512xf32>
    %46 = arith.mulf %44, %45 : vector<8x512xf32>
    %47 = arith.addf %22, %46 : vector<8x512xf32>
    %48 = arith.addf %23, %45 : vector<8x512xf32>
    %cst_13 = arith.constant 5.000000e-01 : f32
    %49 = vector.broadcast %cst_13 : f32 to vector<8x512xf32>
    %50 = arith.cmpf ogt, %36, %49 : vector<8x512xf32>
    %51 = arith.extui %50 : vector<8x512xi1> to vector<8x512xi32>
    %52 = arith.sitofp %51 : vector<8x512xi32> to vector<8x512xf32>
    %53 = arith.addf %28, %52 : vector<8x512xf32>
    %c2_i32 = arith.constant 2 : i32
    %c8_i32_14 = arith.constant 8 : i32
    %54 = arith.muli %c2_i32, %c8_i32_14 : i32
    %55 = tpu.assume_multiple %54, 8 : i32
    %56 = arith.index_cast %55 : i32 to index
    %c0_15 = arith.constant 0 : index
    %57 = vector.load %arg2[%56, %c0_15] : memref<32x512xf32, #tpu.memory_space<vmem>>, vector<8x512xf32>
    %58 = arith.index_cast %55 : i32 to index
    %c0_16 = arith.constant 0 : index
    %59 = vector.load %arg3[%58, %c0_16] : memref<32x512xf32, #tpu.memory_space<vmem>>, vector<8x512xf32>
    %60 = arith.index_cast %55 : i32 to index
    %c0_17 = arith.constant 0 : index
    %61 = vector.load %arg4[%60, %c0_17] : memref<32x512xf32, #tpu.memory_space<vmem>>, vector<8x512xf32>
    %62 = arith.mulf %57, %61 : vector<8x512xf32>
    %cst_18 = arith.constant 9.99999997E-7 : f32
    %63 = vector.broadcast %cst_18 : f32 to vector<8x512xf32>
    %64 = arith.addf %62, %63 : vector<8x512xf32>
    %65 = arith.mulf %59, %61 : vector<8x512xf32>
    %cst_19 = arith.constant 9.99999997E-7 : f32
    %66 = vector.broadcast %cst_19 : f32 to vector<8x512xf32>
    %67 = arith.addf %65, %66 : vector<8x512xf32>
    %68 = arith.divf %64, %67 : vector<8x512xf32>
    %69 = math.log %68 : vector<8x512xf32>
    %70 = arith.mulf %69, %61 : vector<8x512xf32>
    %71 = arith.mulf %69, %70 : vector<8x512xf32>
    %72 = arith.addf %47, %71 : vector<8x512xf32>
    %73 = arith.addf %48, %70 : vector<8x512xf32>
    %cst_20 = arith.constant 5.000000e-01 : f32
    %74 = vector.broadcast %cst_20 : f32 to vector<8x512xf32>
    %75 = arith.cmpf ogt, %61, %74 : vector<8x512xf32>
    %76 = arith.extui %75 : vector<8x512xi1> to vector<8x512xi32>
    %77 = arith.sitofp %76 : vector<8x512xi32> to vector<8x512xf32>
    %78 = arith.addf %53, %77 : vector<8x512xf32>
    %c3_i32 = arith.constant 3 : i32
    %c8_i32_21 = arith.constant 8 : i32
    %79 = arith.muli %c3_i32, %c8_i32_21 : i32
    %80 = tpu.assume_multiple %79, 8 : i32
    %81 = arith.index_cast %80 : i32 to index
    %c0_22 = arith.constant 0 : index
    %82 = vector.load %arg2[%81, %c0_22] : memref<32x512xf32, #tpu.memory_space<vmem>>, vector<8x512xf32>
    %83 = arith.index_cast %80 : i32 to index
    %c0_23 = arith.constant 0 : index
    %84 = vector.load %arg3[%83, %c0_23] : memref<32x512xf32, #tpu.memory_space<vmem>>, vector<8x512xf32>
    %85 = arith.index_cast %80 : i32 to index
    %c0_24 = arith.constant 0 : index
    %86 = vector.load %arg4[%85, %c0_24] : memref<32x512xf32, #tpu.memory_space<vmem>>, vector<8x512xf32>
    %87 = arith.mulf %82, %86 : vector<8x512xf32>
    %cst_25 = arith.constant 9.99999997E-7 : f32
    %88 = vector.broadcast %cst_25 : f32 to vector<8x512xf32>
    %89 = arith.addf %87, %88 : vector<8x512xf32>
    %90 = arith.mulf %84, %86 : vector<8x512xf32>
    %cst_26 = arith.constant 9.99999997E-7 : f32
    %91 = vector.broadcast %cst_26 : f32 to vector<8x512xf32>
    %92 = arith.addf %90, %91 : vector<8x512xf32>
    %93 = arith.divf %89, %92 : vector<8x512xf32>
    %94 = math.log %93 : vector<8x512xf32>
    %95 = arith.mulf %94, %86 : vector<8x512xf32>
    %96 = arith.mulf %94, %95 : vector<8x512xf32>
    %97 = arith.addf %72, %96 : vector<8x512xf32>
    %98 = arith.addf %73, %95 : vector<8x512xf32>
    %cst_27 = arith.constant 5.000000e-01 : f32
    %99 = vector.broadcast %cst_27 : f32 to vector<8x512xf32>
    %100 = arith.cmpf ogt, %86, %99 : vector<8x512xf32>
    %101 = arith.extui %100 : vector<8x512xi1> to vector<8x512xi32>
    %102 = arith.sitofp %101 : vector<8x512xi32> to vector<8x512xf32>
    %103 = arith.addf %78, %102 : vector<8x512xf32>
    %c4_i32 = arith.constant 4 : i32
    %c0_28 = arith.constant 0 : index
    %c0_29 = arith.constant 0 : index
    %104 = vector.load %arg5[%c0_28, %c0_29] : memref<8x512xf32, #tpu.memory_space<vmem>>, vector<8x512xf32>
    %105 = arith.addf %104, %97 : vector<8x512xf32>
    %c0_30 = arith.constant 0 : index
    %c0_31 = arith.constant 0 : index
    %106 = vector.load %arg5[%c0_30, %c0_31] : memref<8x512xf32, #tpu.memory_space<vmem>>, vector<8x512xf32>
    tpu.vector_store %arg5[%c0_30, %c0_31], %105 {strides = array<i32>} : memref<8x512xf32, #tpu.memory_space<vmem>>, vector<8x512xf32>,
    %c0_32 = arith.constant 0 : index
    %c0_33 = arith.constant 0 : index
    %107 = vector.load %arg6[%c0_32, %c0_33] : memref<8x512xf32, #tpu.memory_space<vmem>>, vector<8x512xf32>
    %108 = arith.addf %107, %98 : vector<8x512xf32>
    %c0_34 = arith.constant 0 : index
    %c0_35 = arith.constant 0 : index
    %109 = vector.load %arg6[%c0_34, %c0_35] : memref<8x512xf32, #tpu.memory_space<vmem>>, vector<8x512xf32>
    tpu.vector_store %arg6[%c0_34, %c0_35], %108 {strides = array<i32>} : memref<8x512xf32, #tpu.memory_space<vmem>>, vector<8x512xf32>,
    %c0_36 = arith.constant 0 : index
    %c0_37 = arith.constant 0 : index
    %110 = vector.load %arg7[%c0_36, %c0_37] : memref<8x512xf32, #tpu.memory_space<vmem>>, vector<8x512xf32>
    %111 = arith.addf %110, %103 : vector<8x512xf32>
    %c0_38 = arith.constant 0 : index
    %c0_39 = arith.constant 0 : index
    %112 = vector.load %arg7[%c0_38, %c0_39] : memref<8x512xf32, #tpu.memory_space<vmem>>, vector<8x512xf32>
    tpu.vector_store %arg7[%c0_38, %c0_39], %111 {strides = array<i32>} : memref<8x512xf32, #tpu.memory_space<vmem>>, vector<8x512xf32>,
    return
  }
  func.func @transform_0(%arg0: i32, %arg1: i32) -> (i32, i32) {
    %c1_i32 = arith.constant 1 : i32
    %0 = arith.muli %arg0, %c1_i32 : i32
    %1 = arith.addi %0, %arg1 : i32
    %c0_i32 = arith.constant 0 : i32
    %c0_i32_0 = arith.constant 0 : i32
    return %1, %c0_i32 : i32, i32
  }
  func.func @transform_1(%arg0: i32, %arg1: i32) -> (i32, i32) {
    %c1_i32 = arith.constant 1 : i32
    %0 = arith.muli %arg0, %c1_i32 : i32
    %1 = arith.addi %0, %arg1 : i32
    %c0_i32 = arith.constant 0 : i32
    %c0_i32_0 = arith.constant 0 : i32
    return %1, %c0_i32 : i32, i32
  }
  func.func @transform_2(%arg0: i32, %arg1: i32) -> (i32, i32) {
    %c1_i32 = arith.constant 1 : i32
    %0 = arith.muli %arg0, %c1_i32 : i32
    %1 = arith.addi %0, %arg1 : i32
    %c0_i32 = arith.constant 0 : i32
    %c0_i32_0 = arith.constant 0 : i32
    return %1, %c0_i32 : i32, i32
  }
  func.func @transform_3(%arg0: i32, %arg1: i32) -> (i32, i32) {
    %c0_i32 = arith.constant 0 : i32
    %c0_i32_0 = arith.constant 0 : i32
    return %arg0, %c0_i32 : i32, i32
  }
  func.func @transform_4(%arg0: i32, %arg1: i32) -> (i32, i32) {
    %c0_i32 = arith.constant 0 : i32
    %c0_i32_0 = arith.constant 0 : i32
    return %arg0, %c0_i32 : i32, i32
  }
  func.func @transform_5(%arg0: i32, %arg1: i32) -> (i32, i32) {
    %c0_i32 = arith.constant 0 : i32
    %c0_i32_0 = arith.constant 0 : i32
    return %arg0, %c0_i32 : i32, i32
  }
}

</mosaic_0001>

<llo_original>
// kernel: tpu_custom_call.1
$region0: #{tpu_custom_call.1}
  #allocation0 [shape = 'u32[]', space=smem, size = 0x4, offset = 0x4, fixed_abs, tag = 'smem constant byte address 0x4 - core index']
  #allocation1 [shape = 'u32[144,128]{1,0:T(1,128)}', space=vmem, size = 0x12000, scoped, tag = 'internal scratch']
  %s0 = inlined_call_operand.hbm [shape: f32[64,512], index: 0, kind: input, shape index: {}]
  %s1 = inlined_call_operand.hbm [shape: f32[64,512], index: 1, kind: input, shape index: {}]
  %s2 = inlined_call_operand.hbm [shape: f32[64,512], index: 2, kind: input, shape index: {}]
  %s3 = inlined_call_operand.hbm [shape: f32[16,512], index: 3, kind: output, shape index: {0}]
  %s4 = inlined_call_operand.hbm [shape: f32[16,512], index: 4, kind: output, shape index: {1}]
  %s5 = inlined_call_operand.hbm [shape: f32[16,512], index: 5, kind: output, shape index: {2}]
  %6 = xla_tuple %s3, %s4, %s5
  %s7 = sld [smem:[#allocation0]]
  $region77: #{tpu_custom_call.1} parent=0
    _
  %s9 = ssub.s32 1, %s7
  %s10 = scalar_select 0, %s9, %s7
  $region1: #{tpu_custom_call.1} parent=0
    #allocation2 [shape = 'u8[131072]{0}', space=vmem, size = 0x20000, scoped, tag = 'input window, operand 0']
    #allocation3 [shape = 's32[2]{0}', space=sflag, size = 0x8, scoped, tag = 'scoped memory for tpu_custom_call.1']
    #allocation4 [shape = 's32[2]{0}', space=sflag, size = 0x8, scoped, tag = 'scoped memory for tpu_custom_call.1']
    #allocation5 [shape = 'u8[131072]{0}', space=vmem, size = 0x20000, scoped, tag = 'input window, operand 1']
    #allocation6 [shape = 's32[2]{0}', space=sflag, size = 0x8, scoped, tag = 'scoped memory for tpu_custom_call.1']
    #allocation7 [shape = 'u8[131072]{0}', space=vmem, size = 0x20000, scoped, tag = 'input window, operand 2']
    #allocation8 [shape = 'u8[32768]{0}', space=vmem, size = 0x8000, scoped, tag = 'output window, operand 0']
    #allocation9 [shape = 'u8[32768]{0}', space=vmem, size = 0x8000, scoped, tag = 'output window, operand 1']
    #allocation10 [shape = 's32[2]{0}', space=sflag, size = 0x8, scoped, tag = 'scoped memory for tpu_custom_call.1']
    #allocation11 [shape = 'u8[32768]{0}', space=vmem, size = 0x8000, scoped, tag = 'output window, operand 2']
    %11 = vsyncpa [#allocation3], 0
    %s12 = scalar_lea.sflag [#allocation3], 1
    %13 = vsyncpa %s12, 0
    %14 = vsyncpa [#allocation6], 0
    %s15 = scalar_lea.sflag [#allocation6], 1
    %16 = vsyncpa %s15, 0
    %17 = vsyncpa [#allocation4], 0
    %s18 = scalar_lea.sflag [#allocation4], 1
    %19 = vsyncpa %s18, 0
    %20 = vsyncpa [#allocation10], 0
    %s21 = scalar_lea.sflag [#allocation10], 1
    %22 = vsyncpa %s21, 0
    loop: start=0, step=1, limit=4
    $region2: #{tpu_custom_call.1} parent=1 // loop_pre_header
      _
    $region3: #{tpu_custom_call.1} parent=1 // loop_header
      %s24 = sphi 0, %s28
      %p25 = scmp.ge.s32.totalorder %s24, 4
      %s31 = sphi 0, %s43
      %s32 = sphi 0, %s39
      %s33 = sphi 0, %s31
      %s34 = sphi 0, %s32
      %s35 = sphi 0, %s33
      %s36 = sphi 0, %s34
      %s48 = sphi 0, %s50
      %s51 = sphi 0, %s48
      %s52 = sphi 0, %s51
      %s68 = sphi 0, %s52
      %s76 = sphi 0, %s78
      %s79 = sphi 0, %s76
      %s80 = sphi 0, %s79
      %s96 = sphi 0, %s80
      %s104 = sphi 0, %s106
      %s107 = sphi 0, %s104
      %s108 = sphi 0, %s107
      %s124 = sphi 0, %s108
      %s130 = sphi 0, %s132
      %s133 = sphi 0, %s130
      %s134 = sphi 0, %s133
      %s150 = sphi 0, %s134
      %s156 = sphi 0, %s158
      %s159 = sphi 0, %s156
      %s160 = sphi 0, %s159
      %s176 = sphi 0, %s160
      %s182 = sphi 0, %s184
      %s185 = sphi 0, %s182
      %s186 = sphi 0, %s185
      %s202 = sphi 0, %s186
    $region4: #{tpu_custom_call.1} parent=1 // loop_header_branch
      %27 = sbr.rel (%p25) target = $region8
    $region5: #{tpu_custom_call.1} parent=1 // loop_body
      %s29 = ssub.s32 %s24, 1
      %s30 = ssub.s32 %s24, 2
      %s37 = sadd.s32 1, %s32
      %p38 = scmp.ge.s32.totalorder %s37, 1
      %s39 = scalar_select %p38, 0, %s37
      %s40 = sadd.s32 1, %s31
      %s41 = scalar_select %p38, %s40, %s31
      %p42 = scmp.ge.s32.totalorder %s41, 2
      %s43 = scalar_select %p42, 0, %s41
      %s44 = sadd.s32 %s31, %s32
      %s45 = sadd.s32 %s43, %s39
      %s46 = ssub.s32 %s44, %s45
      %p47 = scmp.eq.s32.totalorder %s46, 0
      %s49 = sadd.s32 %s48, 1
      %s50 = scalar_select %p47, %s48, %s49
      %p53 = pneg %p47
      %p54 = scmp.eq.s32.totalorder %s24, 1
      %p55 = por %p53, %p54
      %p56 = scmp.ne.s32.totalorder %s48, %s51
      %p57 = scmp.eq.s32.totalorder %s24, 0
      %p58 = por %p56, %p57
      %p59 = scmp.ne.s32.totalorder %s48, %s51
      %p60 = scmp.eq.s32.totalorder %s29, 1
      %p61 = por %p59, %p60
      %p62 = scmp.ne.s32.totalorder %s51, %s52
      %p63 = scmp.eq.s32.totalorder %s29, 0
      %p64 = por %p62, %p63
      %p65 = scmp.ne.s32.totalorder %s51, %s52
      %p66 = scmp.eq.s32.totalorder %s30, 1
      %p67 = por %p65, %p66
      %p69 = scmp.ne.s32.totalorder %s52, %s68
      %p70 = scmp.eq.s32.totalorder %s30, 0
      %p71 = por %p69, %p70
      %s72 = sadd.s32 %s31, %s32
      %s73 = sadd.s32 %s43, %s39
      %s74 = ssub.s32 %s72, %s73
      %p75 = scmp.eq.s32.totalorder %s74, 0
      %s77 = sadd.s32 %s76, 1
      %s78 = scalar_select %p75, %s76, %s77
      %p81 = pneg %p75
      %p82 = scmp.eq.s32.totalorder %s24, 1
      %p83 = por %p81, %p82
      %p84 = scmp.ne.s32.totalorder %s76, %s79
      %p85 = scmp.eq.s32.totalorder %s24, 0
      %p86 = por %p84, %p85
      %p87 = scmp.ne.s32.totalorder %s76, %s79
      %p88 = scmp.eq.s32.totalorder %s29, 1
      %p89 = por %p87, %p88
      %p90 = scmp.ne.s32.totalorder %s79, %s80
      %p91 = scmp.eq.s32.totalorder %s29, 0
      %p92 = por %p90, %p91
      %p93 = scmp.ne.s32.totalorder %s79, %s80
      %p94 = scmp.eq.s32.totalorder %s30, 1
      %p95 = por %p93, %p94
      %p97 = scmp.ne.s32.totalorder %s80, %s96
      %p98 = scmp.eq.s32.totalorder %s30, 0
      %p99 = por %p97, %p98
      %s100 = sadd.s32 %s31, %s32
      %s101 = sadd.s32 %s43, %s39
      %s102 = ssub.s32 %s100, %s101
      %p103 = scmp.eq.s32.totalorder %s102, 0
      %s105 = sadd.s32 %s104, 1
      %s106 = scalar_select %p103, %s104, %s105
      %p109 = pneg %p103
      %p110 = scmp.eq.s32.totalorder %s24, 1
      %p111 = por %p109, %p110
      %p112 = scmp.ne.s32.totalorder %s104, %s107
      %p113 = scmp.eq.s32.totalorder %s24, 0
      %p114 = por %p112, %p113
      %p115 = scmp.ne.s32.totalorder %s104, %s107
      %p116 = scmp.eq.s32.totalorder %s29, 1
      %p117 = por %p115, %p116
      %p118 = scmp.ne.s32.totalorder %s107, %s108
      %p119 = scmp.eq.s32.totalorder %s29, 0
      %p120 = por %p118, %p119
      %p121 = scmp.ne.s32.totalorder %s107, %s108
      %p122 = scmp.eq.s32.totalorder %s30, 1
      %p123 = por %p121, %p122
      %p125 = scmp.ne.s32.totalorder %s108, %s124
      %p126 = scmp.eq.s32.totalorder %s30, 0
      %p127 = por %p125, %p126
      %s128 = ssub.s32 %s31, %s43
      %p129 = scmp.eq.s32.totalorder %s128, 0
      %s131 = sadd.s32 %s130, 1
      %s132 = scalar_select %p129, %s130, %s131
      %p135 = pneg %p129
      %p136 = scmp.eq.s32.totalorder %s24, 1
      %p137 = por %p135, %p136
      %p138 = scmp.ne.s32.totalorder %s130, %s133
      %p139 = scmp.eq.s32.totalorder %s24, 0
      %p140 = por %p138, %p139
      %p141 = scmp.ne.s32.totalorder %s130, %s133
      %p142 = scmp.eq.s32.totalorder %s29, 1
      %p143 = por %p141, %p142
      %p144 = scmp.ne.s32.totalorder %s133, %s134
      %p145 = scmp.eq.s32.totalorder %s29, 0
      %p146 = por %p144, %p145
      %p147 = scmp.ne.s32.totalorder %s133, %s134
      %p148 = scmp.eq.s32.totalorder %s30, 1
      %p149 = por %p147, %p148
      %p151 = scmp.ne.s32.totalorder %s134, %s150
      %p152 = scmp.eq.s32.totalorder %s30, 0
      %p153 = por %p151, %p152
      %s154 = ssub.s32 %s31, %s43
      %p155 = scmp.eq.s32.totalorder %s154, 0
      %s157 = sadd.s32 %s156, 1
      %s158 = scalar_select %p155, %s156, %s157
      %p161 = pneg %p155
      %p162 = scmp.eq.s32.totalorder %s24, 1
      %p163 = por %p161, %p162
      %p164 = scmp.ne.s32.totalorder %s156, %s159
      %p165 = scmp.eq.s32.totalorder %s24, 0
      %p166 = por %p164, %p165
      %p167 = scmp.ne.s32.totalorder %s156, %s159
      %p168 = scmp.eq.s32.totalorder %s29, 1
      %p169 = por %p167, %p168
      %p170 = scmp.ne.s32.totalorder %s159, %s160
      %p171 = scmp.eq.s32.totalorder %s29, 0
      %p172 = por %p170, %p171
      %p173 = scmp.ne.s32.totalorder %s159, %s160
      %p174 = scmp.eq.s32.totalorder %s30, 1
      %p175 = por %p173, %p174
      %p177 = scmp.ne.s32.totalorder %s160, %s176
      %p178 = scmp.eq.s32.totalorder %s30, 0
      %p179 = por %p177, %p178
      %s180 = ssub.s32 %s31, %s43
      %p181 = scmp.eq.s32.totalorder %s180, 0
      %s183 = sadd.s32 %s182, 1
      %s184 = scalar_select %p181, %s182, %s183
      %p187 = pneg %p181
      %p188 = scmp.eq.s32.totalorder %s24, 1
      %p189 = por %p187, %p188
      %p190 = scmp.ne.s32.totalorder %s182, %s185
      %p191 = scmp.eq.s32.totalorder %s24, 0
      %p192 = por %p190, %p191
      %p193 = scmp.ne.s32.totalorder %s182, %s185
      %p194 = scmp.eq.s32.totalorder %s29, 1
      %p195 = por %p193, %p194
      %p196 = scmp.ne.s32.totalorder %s185, %s186
      %p197 = scmp.eq.s32.totalorder %s29, 0
      %p198 = por %p196, %p197
      %p199 = scmp.ne.s32.totalorder %s185, %s186
      %p200 = scmp.eq.s32.totalorder %s30, 1
      %p201 = por %p199, %p200
      %p203 = scmp.ne.s32.totalorder %s186, %s202
      %p204 = scmp.eq.s32.totalorder %s30, 0
      %p205 = por %p203, %p204
      %p206 = scmp.le.s32.totalorder 1, %s24
      %p207 = scmp.lt.s32.totalorder %s24, 3
      %p208 = pnand %p206, %p207
      %p209 = pneg %p208
      // Predicated region
      $region9: #{tpu_custom_call.1} parent=5 // pred_check
        _
      $region10: #{tpu_custom_call.1} parent=5 // pred_check_branch
        %211 = sbr.rel (%p208) target = $region12
      $region11: #{tpu_custom_call.1} parent=5 // pred_region
        %s212 = ssub.s32 %s24, 1
      $region12: #{tpu_custom_call.1} parent=5 // pred_fallthru
        _
      %p213 = scmp.lt.s32.totalorder %s24, 2
      // Predicated region
      $region13: #{tpu_custom_call.1} parent=5 // pred_check
        %p214 = pneg %p213
      $region14: #{tpu_custom_call.1} parent=5 // pred_check_branch
        %216 = sbr.rel (%p214) target = $region16
      $region15: #{tpu_custom_call.1} parent=5 // pred_region
        // Predicated region
        $region17: #{tpu_custom_call.1} parent=15 // pred_check
          %p217 = pneg %p58
        $region18: #{tpu_custom_call.1} parent=15 // pred_check_branch
          %219 = sbr.rel (%p217) target = $region20
        $region19: #{tpu_custom_call.1} parent=15 // pred_region
          %s220 = sand.u32 %s48, 1
          %s221 = scalar_lea.sflag [#allocation3], %s220
          %s222 = sand.u32 %s48, 1
          %s223 = smul.addr %s222, 128
          %s224 = scalar_lea.vmem [#allocation2], %s223
          %s225 = sadd.s32 %s31, %s32
          %s226 = smul.u32 4, %s225
          %s228 = ssub.s32 2048, 2048
          %229 = vsyncadd %s221, %s228
          %s230 = smul.addr %s226, 4
          %s231 = smul.addr %s230, 128
          %s232 = scalar_lea.hbm %s0, %s231
          %s233 = sshll.u32 %s224, 4
          %s234 = int_to_ptr.vmem [resolvable:$true] %s233
          %239 = dma.hbm_to_vmem [thread:$0]  %s232, 2048, %s234, %s221, 512, 512, 32
        $region20: #{tpu_custom_call.1} parent=15 // pred_fallthru
          _
        // Predicated region
        $region21: #{tpu_custom_call.1} parent=15 // pred_check
          %p240 = pneg %p86
        $region22: #{tpu_custom_call.1} parent=15 // pred_check_branch
          %242 = sbr.rel (%p240) target = $region24
        $region23: #{tpu_custom_call.1} parent=15 // pred_region
          %s243 = sand.u32 %s24, 1
          %s244 = scalar_lea.sflag [#allocation6], %s243
          %s245 = sand.u32 %s76, 1
          %s246 = smul.addr %s245, 128
          %s247 = scalar_lea.vmem [#allocation5], %s246
          %s248 = sadd.s32 %s31, %s32
          %s249 = smul.u32 4, %s248
          %s251 = ssub.s32 2048, 2048
          %252 = vsyncadd %s244, %s251
          %s253 = smul.addr %s249, 4
          %s254 = smul.addr %s253, 128
          %s255 = scalar_lea.hbm %s1, %s254
          %s256 = sshll.u32 %s247, 4
          %s257 = int_to_ptr.vmem [resolvable:$true] %s256
          %262 = dma.hbm_to_vmem [thread:$0]  %s255, 2048, %s257, %s244, 512, 512, 32
        $region24: #{tpu_custom_call.1} parent=15 // pred_fallthru
          _
        // Predicated region
        $region25: #{tpu_custom_call.1} parent=15 // pred_check
          %p263 = pneg %p114
        $region26: #{tpu_custom_call.1} parent=15 // pred_check_branch
          %265 = sbr.rel (%p263) target = $region28
        $region27: #{tpu_custom_call.1} parent=15 // pred_region
          %s266 = sand.u32 %s24, 1
          %s267 = scalar_lea.sflag [#allocation6], %s266
          %s268 = sand.u32 %s104, 1
          %s269 = smul.addr %s268, 128
          %s270 = scalar_lea.vmem [#allocation7], %s269
          %s271 = sadd.s32 %s31, %s32
          %s272 = smul.u32 4, %s271
          %s274 = ssub.s32 2048, 2048
          %275 = vsyncadd %s267, %s274
          %s276 = smul.addr %s272, 4
          %s277 = smul.addr %s276, 128
          %s278 = scalar_lea.hbm %s2, %s277
          %s279 = sshll.u32 %s270, 4
          %s280 = int_to_ptr.vmem [resolvable:$true] %s279
          %285 = dma.hbm_to_vmem [thread:$0]  %s278, 2048, %s280, %s267, 512, 512, 32
        $region28: #{tpu_custom_call.1} parent=15 // pred_fallthru
          _
      $region16: #{tpu_custom_call.1} parent=5 // pred_fallthru
        _
      %p286 = scmp.le.s32.totalorder 1, %s24
      %p287 = scmp.lt.s32.totalorder %s24, 3
      %p288 = pnand %p286, %p287
      %p289 = pneg %p288
      // Predicated region
      $region29: #{tpu_custom_call.1} parent=5 // pred_check
        _
      $region30: #{tpu_custom_call.1} parent=5 // pred_check_branch
        %291 = sbr.rel (%p288) target = $region32
      $region31: #{tpu_custom_call.1} parent=5 // pred_region
        %s292 = ssub.s32 %s24, 1
        %s293 = sand.u32 %s51, 1
        %s294 = scalar_lea.sflag [#allocation3], %s293
        %s295 = sand.u32 %s51, 1
        %s296 = smul.addr %s295, 128
        %s297 = scalar_lea.vmem [#allocation2], %s296
        // Predicated region
        $region33: #{tpu_custom_call.1} parent=31 // pred_check
          %p298 = pneg %p64
        $region34: #{tpu_custom_call.1} parent=31 // pred_check_branch
          %300 = sbr.rel (%p298) target = $region36
        $region35: #{tpu_custom_call.1} parent=31 // pred_region
          %301 = dma.done %s294, 2048
        $region36: #{tpu_custom_call.1} parent=31 // pred_fallthru
          _
        %s302 = sand.u32 %s29, 1
        %s303 = scalar_lea.sflag [#allocation6], %s302
        %s304 = sand.u32 %s79, 1
        %s305 = smul.addr %s304, 128
        %s306 = scalar_lea.vmem [#allocation5], %s305
        // Predicated region
        $region37: #{tpu_custom_call.1} parent=31 // pred_check
          %p307 = pneg %p92
        $region38: #{tpu_custom_call.1} parent=31 // pred_check_branch
          %309 = sbr.rel (%p307) target = $region40
        $region39: #{tpu_custom_call.1} parent=31 // pred_region
          %310 = dma.done %s303, 2048
        $region40: #{tpu_custom_call.1} parent=31 // pred_fallthru
          _
        %s311 = sand.u32 %s29, 1
        %s312 = scalar_lea.sflag [#allocation6], %s311
        %s313 = sand.u32 %s107, 1
        %s314 = smul.addr %s313, 128
        %s315 = scalar_lea.vmem [#allocation7], %s314
        // Predicated region
        $region41: #{tpu_custom_call.1} parent=31 // pred_check
          %p316 = pneg %p120
        $region42: #{tpu_custom_call.1} parent=31 // pred_check_branch
          %318 = sbr.rel (%p316) target = $region44
        $region43: #{tpu_custom_call.1} parent=31 // pred_region
          %319 = dma.done %s312, 2048
        $region44: #{tpu_custom_call.1} parent=31 // pred_fallthru
          _
        %s320 = sand.u32 %s51, 1
        %s321 = scalar_lea.sflag [#allocation3], %s320
        %s322 = sand.u32 %s51, 1
        %s323 = smul.addr %s322, 128
        %s324 = scalar_lea.vmem [#allocation2], %s323
        %p325 = pneg %p64
        %p326 = pneg %p61
        %s327 = sand.u32 %s29, 1
        %s328 = scalar_lea.sflag [#allocation6], %s327
        %s329 = sand.u32 %s79, 1
        %s330 = smul.addr %s329, 128
        %s331 = scalar_lea.vmem [#allocation5], %s330
        %p332 = pneg %p92
        %p333 = pneg %p89
        %s334 = sand.u32 %s29, 1
        %s335 = scalar_lea.sflag [#allocation6], %s334
        %s336 = sand.u32 %s107, 1
        %s337 = smul.addr %s336, 128
        %s338 = scalar_lea.vmem [#allocation7], %s337
        %p339 = pneg %p120
        %p340 = pneg %p117
        %p341 = pneg %p146
        %p342 = pneg %p143
        %s343 = sand.u32 %s133, 1
        %s344 = scalar_lea.sflag [#allocation4], %s343
        %s345 = sand.u32 %s133, 1
        %s346 = smul.addr %s345, 32
        %s347 = scalar_lea.vmem [#allocation8], %s346
        %p348 = pneg %p172
        %p349 = pneg %p169
        %s350 = sand.u32 %s29, 1
        %s351 = scalar_lea.sflag [#allocation10], %s350
        %s352 = sand.u32 %s159, 1
        %s353 = smul.addr %s352, 32
        %s354 = scalar_lea.vmem [#allocation9], %s353
        %p355 = pneg %p198
        %p356 = pneg %p195
        %s357 = sand.u32 %s29, 1
        %s358 = scalar_lea.sflag [#allocation10], %s357
        %s359 = sand.u32 %s185, 1
        %s360 = smul.addr %s359, 32
        %s361 = scalar_lea.vmem [#allocation11], %s360
        %s362 = sadd.s32 %s33, %s34
        %s363 = smul.u32 4, %s362
        %s364 = sadd.s32 %s33, %s34
        %s365 = smul.u32 4, %s364
        %s366 = sadd.s32 %s33, %s34
        %s367 = smul.u32 4, %s366
        %p368 = scmp.eq.s32.totalorder %s34, 0
        // Predicated region
        $region45: #{tpu_custom_call.1} parent=31 // pred_check
          %p369 = pneg %p368
        $region46: #{tpu_custom_call.1} parent=31 // pred_check_branch
          %371 = sbr.rel (%p369) target = $region48
        $region47: #{tpu_custom_call.1} parent=31 // pred_region
          %372 = vst [vmem:[%s347] sm:$0xff] 0.0
          %373 = vst [vmem:[%s347 + $0x8] sm:$0xff] 0.0
          %374 = vst [vmem:[%s347 + $0x10] sm:$0xff] 0.0
          %375 = vst [vmem:[%s347 + $0x18] sm:$0xff] 0.0
          %376 = vst [vmem:[%s354] sm:$0xff] 0.0
          %377 = vst [vmem:[%s354 + $0x8] sm:$0xff] 0.0
          %378 = vst [vmem:[%s354 + $0x10] sm:$0xff] 0.0
          %379 = vst [vmem:[%s354 + $0x18] sm:$0xff] 0.0
          %380 = vst [vmem:[%s361] sm:$0xff] 0.0
          %381 = vst [vmem:[%s361 + $0x8] sm:$0xff] 0.0
          %382 = vst [vmem:[%s361 + $0x10] sm:$0xff] 0.0
          %383 = vst [vmem:[%s361 + $0x18] sm:$0xff] 0.0
        $region48: #{tpu_custom_call.1} parent=31 // pred_fallthru
          _
        %s384 = smul.u32 0, 4
        %s385 = smul.addr %s384, 8
        %s386 = scalar_lea.vmem %s297, %s385 [#allocation2]
        %v387 = vld [vmem:[%s386] sm:$0xff]
        %v388 = vld [vmem:[%s386 + $0x8] sm:$0xff]
        %v389 = vld [vmem:[%s386 + $0x10] sm:$0xff]
        %v390 = vld [vmem:[%s386 + $0x18] sm:$0xff]
        %s391 = smul.addr %s384, 8
        %s392 = scalar_lea.vmem %s306, %s391 [#allocation5]
        %v393 = vld [vmem:[%s392] sm:$0xff]
        %v394 = vld [vmem:[%s392 + $0x8] sm:$0xff]
        %v395 = vld [vmem:[%s392 + $0x10] sm:$0xff]
        %v396 = vld [vmem:[%s392 + $0x18] sm:$0xff]
        %s397 = smul.addr %s384, 8
        %s398 = scalar_lea.vmem %s315, %s397 [#allocation7]
        %v399 = vld [vmem:[%s398] sm:$0xff]
        %v400 = vld [vmem:[%s398 + $0x8] sm:$0xff]
        %v401 = vld [vmem:[%s398 + $0x10] sm:$0xff]
        %v402 = vld [vmem:[%s398 + $0x18] sm:$0xff]
        %v403 = vmul.f32 %v387, %v399
        %v404 = vmul.f32 %v388, %v400
        %v405 = vmul.f32 %v389, %v401
        %v406 = vmul.f32 %v390, %v402
        %v407 = vadd.f32 %v403, 1e-06
        %v408 = vadd.f32 %v404, 1e-06
        %v409 = vadd.f32 %v405, 1e-06
        %v410 = vadd.f32 %v406, 1e-06
        %v411 = vmul.f32 %v393, %v399
        %v412 = vmul.f32 %v394, %v400
        %v413 = vmul.f32 %v395, %v401
        %v414 = vmul.f32 %v396, %v402
        %v415 = vadd.f32 %v411, 1e-06
        %v416 = vadd.f32 %v412, 1e-06
        %v417 = vadd.f32 %v413, 1e-06
        %v418 = vadd.f32 %v414, 1e-06
        %v419 = vrcp.pop %v415
        %v420 = vmul.f32 %v407, %v419
        %v421 = vrcp.pop %v416
        %v422 = vmul.f32 %v408, %v421
        %v423 = vrcp.pop %v417
        %v424 = vmul.f32 %v409, %v423
        %v425 = vrcp.pop %v418
        %v426 = vmul.f32 %v410, %v425
        %v427 = vlog2.pop %v420
        %v428 = vmul.f32 %v427, 0.6931472
        %v429 = vlog2.pop %v422
        %v430 = vmul.f32 %v429, 0.6931472
        %v431 = vlog2.pop %v424
        %v432 = vmul.f32 %v431, 0.6931472
        %v433 = vlog2.pop %v426
        %v434 = vmul.f32 %v433, 0.6931472
        %v435 = vmul.f32 %v428, %v399
        %v436 = vmul.f32 %v430, %v400
        %v437 = vmul.f32 %v432, %v401
        %v438 = vmul.f32 %v434, %v402
        %v439 = vmul.f32 %v428, %v435
        %v440 = vmul.f32 %v430, %v436
        %v441 = vmul.f32 %v432, %v437
        %v442 = vmul.f32 %v434, %v438
        %v443 = vadd.f32 %v439, 0.0
        %v444 = vadd.f32 %v440, 0.0
        %v445 = vadd.f32 %v441, 0.0
        %v446 = vadd.f32 %v442, 0.0
        %v447 = vadd.f32 %v435, 0.0
        %v448 = vadd.f32 %v436, 0.0
        %v449 = vadd.f32 %v437, 0.0
        %v450 = vadd.f32 %v438, 0.0
        %vm451 = vcmp.gt.f32.partialorder %v399, 0.5
        %vm452 = vcmp.gt.f32.partialorder %v400, 0.5
        %vm453 = vcmp.gt.f32.partialorder %v401, 0.5
        %vm454 = vcmp.gt.f32.partialorder %v402, 0.5
        %v455 = vsel %vm451, 1, 0
        %v456 = vsel %vm452, 1, 0
        %v457 = vsel %vm453, 1, 0
        %v458 = vsel %vm454, 1, 0
        %v459 = vcvt.s32.f32 %v455
        %v460 = vcvt.s32.f32 %v456
        %v461 = vcvt.s32.f32 %v457
        %v462 = vcvt.s32.f32 %v458
        %v463 = vadd.f32 %v459, 0.0
        %v464 = vadd.f32 %v460, 0.0
        %v465 = vadd.f32 %v461, 0.0
        %v466 = vadd.f32 %v462, 0.0
        %s467 = smul.u32 1, 4
        %s468 = smul.addr %s467, 8
        %s469 = scalar_lea.vmem %s297, %s468 [#allocation2]
        %v470 = vld [vmem:[%s469] sm:$0xff]
        %v471 = vld [vmem:[%s469 + $0x8] sm:$0xff]
        %v472 = vld [vmem:[%s469 + $0x10] sm:$0xff]
        %v473 = vld [vmem:[%s469 + $0x18] sm:$0xff]
        %s474 = smul.addr %s467, 8
        %s475 = scalar_lea.vmem %s306, %s474 [#allocation5]
        %v476 = vld [vmem:[%s475] sm:$0xff]
        %v477 = vld [vmem:[%s475 + $0x8] sm:$0xff]
        %v478 = vld [vmem:[%s475 + $0x10] sm:$0xff]
        %v479 = vld [vmem:[%s475 + $0x18] sm:$0xff]
        %s480 = smul.addr %s467, 8
        %s481 = scalar_lea.vmem %s315, %s480 [#allocation7]
        %v482 = vld [vmem:[%s481] sm:$0xff]
        %v483 = vld [vmem:[%s481 + $0x8] sm:$0xff]
        %v484 = vld [vmem:[%s481 + $0x10] sm:$0xff]
        %v485 = vld [vmem:[%s481 + $0x18] sm:$0xff]
        %v486 = vmul.f32 %v470, %v482
        %v487 = vmul.f32 %v471, %v483
        %v488 = vmul.f32 %v472, %v484
        %v489 = vmul.f32 %v473, %v485
        %v490 = vadd.f32 %v486, 1e-06
        %v491 = vadd.f32 %v487, 1e-06
        %v492 = vadd.f32 %v488, 1e-06
        %v493 = vadd.f32 %v489, 1e-06
        %v494 = vmul.f32 %v476, %v482
        %v495 = vmul.f32 %v477, %v483
        %v496 = vmul.f32 %v478, %v484
        %v497 = vmul.f32 %v479, %v485
        %v498 = vadd.f32 %v494, 1e-06
        %v499 = vadd.f32 %v495, 1e-06
        %v500 = vadd.f32 %v496, 1e-06
        %v501 = vadd.f32 %v497, 1e-06
        %v502 = vrcp.pop %v498
        %v503 = vmul.f32 %v490, %v502
        %v504 = vrcp.pop %v499
        %v505 = vmul.f32 %v491, %v504
        %v506 = vrcp.pop %v500
        %v507 = vmul.f32 %v492, %v506
        %v508 = vrcp.pop %v501
        %v509 = vmul.f32 %v493, %v508
        %v510 = vlog2.pop %v503
        %v511 = vmul.f32 %v510, 0.6931472
        %v512 = vlog2.pop %v505
        %v513 = vmul.f32 %v512, 0.6931472
        %v514 = vlog2.pop %v507
        %v515 = vmul.f32 %v514, 0.6931472
        %v516 = vlog2.pop %v509
        %v517 = vmul.f32 %v516, 0.6931472
        %v518 = vmul.f32 %v511, %v482
        %v519 = vmul.f32 %v513, %v483
        %v520 = vmul.f32 %v515, %v484
        %v521 = vmul.f32 %v517, %v485
        %v522 = vmul.f32 %v511, %v518
        %v523 = vmul.f32 %v513, %v519
        %v524 = vmul.f32 %v515, %v520
        %v525 = vmul.f32 %v517, %v521
        %v526 = vadd.f32 %v443, %v522
        %v527 = vadd.f32 %v444, %v523
        %v528 = vadd.f32 %v445, %v524
        %v529 = vadd.f32 %v446, %v525
        %v530 = vadd.f32 %v447, %v518
        %v531 = vadd.f32 %v448, %v519
        %v532 = vadd.f32 %v449, %v520
        %v533 = vadd.f32 %v450, %v521
        %vm534 = vcmp.gt.f32.partialorder %v482, 0.5
        %vm535 = vcmp.gt.f32.partialorder %v483, 0.5
        %vm536 = vcmp.gt.f32.partialorder %v484, 0.5
        %vm537 = vcmp.gt.f32.partialorder %v485, 0.5
        %v538 = vsel %vm534, 1, 0
        %v539 = vsel %vm535, 1, 0
        %v540 = vsel %vm536, 1, 0
        %v541 = vsel %vm537, 1, 0
        %v542 = vcvt.s32.f32 %v538
        %v543 = vcvt.s32.f32 %v539
        %v544 = vcvt.s32.f32 %v540
        %v545 = vcvt.s32.f32 %v541
        %v546 = vadd.f32 %v463, %v542
        %v547 = vadd.f32 %v464, %v543
        %v548 = vadd.f32 %v465, %v544
        %v549 = vadd.f32 %v466, %v545
        %s550 = smul.u32 2, 4
        %s551 = smul.addr %s550, 8
        %s552 = scalar_lea.vmem %s297, %s551 [#allocation2]
        %v553 = vld [vmem:[%s552] sm:$0xff]
        %v554 = vld [vmem:[%s552 + $0x8] sm:$0xff]
        %v555 = vld [vmem:[%s552 + $0x10] sm:$0xff]
        %v556 = vld [vmem:[%s552 + $0x18] sm:$0xff]
        %s557 = smul.addr %s550, 8
        %s558 = scalar_lea.vmem %s306, %s557 [#allocation5]
        %v559 = vld [vmem:[%s558] sm:$0xff]
        %v560 = vld [vmem:[%s558 + $0x8] sm:$0xff]
        %v561 = vld [vmem:[%s558 + $0x10] sm:$0xff]
        %v562 = vld [vmem:[%s558 + $0x18] sm:$0xff]
        %s563 = smul.addr %s550, 8
        %s564 = scalar_lea.vmem %s315, %s563 [#allocation7]
        %v565 = vld [vmem:[%s564] sm:$0xff]
        %v566 = vld [vmem:[%s564 + $0x8] sm:$0xff]
        %v567 = vld [vmem:[%s564 + $0x10] sm:$0xff]
        %v568 = vld [vmem:[%s564 + $0x18] sm:$0xff]
        %v569 = vmul.f32 %v553, %v565
        %v570 = vmul.f32 %v554, %v566
        %v571 = vmul.f32 %v555, %v567
        %v572 = vmul.f32 %v556, %v568
        %v573 = vadd.f32 %v569, 1e-06
        %v574 = vadd.f32 %v570, 1e-06
        %v575 = vadd.f32 %v571, 1e-06
        %v576 = vadd.f32 %v572, 1e-06
        %v577 = vmul.f32 %v559, %v565
        %v578 = vmul.f32 %v560, %v566
        %v579 = vmul.f32 %v561, %v567
        %v580 = vmul.f32 %v562, %v568
        %v581 = vadd.f32 %v577, 1e-06
        %v582 = vadd.f32 %v578, 1e-06
        %v583 = vadd.f32 %v579, 1e-06
        %v584 = vadd.f32 %v580, 1e-06
        %v585 = vrcp.pop %v581
        %v586 = vmul.f32 %v573, %v585
        %v587 = vrcp.pop %v582
        %v588 = vmul.f32 %v574, %v587
        %v589 = vrcp.pop %v583
        %v590 = vmul.f32 %v575, %v589
        %v591 = vrcp.pop %v584
        %v592 = vmul.f32 %v576, %v591
        %v593 = vlog2.pop %v586
        %v594 = vmul.f32 %v593, 0.6931472
        %v595 = vlog2.pop %v588
        %v596 = vmul.f32 %v595, 0.6931472
        %v597 = vlog2.pop %v590
        %v598 = vmul.f32 %v597, 0.6931472
        %v599 = vlog2.pop %v592
        %v600 = vmul.f32 %v599, 0.6931472
        %v601 = vmul.f32 %v594, %v565
        %v602 = vmul.f32 %v596, %v566
        %v603 = vmul.f32 %v598, %v567
        %v604 = vmul.f32 %v600, %v568
        %v605 = vmul.f32 %v594, %v601
        %v606 = vmul.f32 %v596, %v602
        %v607 = vmul.f32 %v598, %v603
        %v608 = vmul.f32 %v600, %v604
        %v609 = vadd.f32 %v526, %v605
        %v610 = vadd.f32 %v527, %v606
        %v611 = vadd.f32 %v528, %v607
        %v612 = vadd.f32 %v529, %v608
        %v613 = vadd.f32 %v530, %v601
        %v614 = vadd.f32 %v531, %v602
        %v615 = vadd.f32 %v532, %v603
        %v616 = vadd.f32 %v533, %v604
        %vm617 = vcmp.gt.f32.partialorder %v565, 0.5
        %vm618 = vcmp.gt.f32.partialorder %v566, 0.5
        %vm619 = vcmp.gt.f32.partialorder %v567, 0.5
        %vm620 = vcmp.gt.f32.partialorder %v568, 0.5
        %v621 = vsel %vm617, 1, 0
        %v622 = vsel %vm618, 1, 0
        %v623 = vsel %vm619, 1, 0
        %v624 = vsel %vm620, 1, 0
        %v625 = vcvt.s32.f32 %v621
        %v626 = vcvt.s32.f32 %v622
        %v627 = vcvt.s32.f32 %v623
        %v628 = vcvt.s32.f32 %v624
        %v629 = vadd.f32 %v546, %v625
        %v630 = vadd.f32 %v547, %v626
        %v631 = vadd.f32 %v548, %v627
        %v632 = vadd.f32 %v549, %v628
        %s633 = smul.u32 3, 4
        %s634 = smul.addr %s633, 8
        %s635 = scalar_lea.vmem %s297, %s634 [#allocation2]
        %v636 = vld [vmem:[%s635] sm:$0xff]
        %v637 = vld [vmem:[%s635 + $0x8] sm:$0xff]
        %v638 = vld [vmem:[%s635 + $0x10] sm:$0xff]
        %v639 = vld [vmem:[%s635 + $0x18] sm:$0xff]
        %s640 = smul.addr %s633, 8
        %s641 = scalar_lea.vmem %s306, %s640 [#allocation5]
        %v642 = vld [vmem:[%s641] sm:$0xff]
        %v643 = vld [vmem:[%s641 + $0x8] sm:$0xff]
        %v644 = vld [vmem:[%s641 + $0x10] sm:$0xff]
        %v645 = vld [vmem:[%s641 + $0x18] sm:$0xff]
        %s646 = smul.addr %s633, 8
        %s647 = scalar_lea.vmem %s315, %s646 [#allocation7]
        %v648 = vld [vmem:[%s647] sm:$0xff]
        %v649 = vld [vmem:[%s647 + $0x8] sm:$0xff]
        %v650 = vld [vmem:[%s647 + $0x10] sm:$0xff]
        %v651 = vld [vmem:[%s647 + $0x18] sm:$0xff]
        %v652 = vmul.f32 %v636, %v648
        %v653 = vmul.f32 %v637, %v649
        %v654 = vmul.f32 %v638, %v650
        %v655 = vmul.f32 %v639, %v651
        %v656 = vadd.f32 %v652, 1e-06
        %v657 = vadd.f32 %v653, 1e-06
        %v658 = vadd.f32 %v654, 1e-06
        %v659 = vadd.f32 %v655, 1e-06
        %v660 = vmul.f32 %v642, %v648
        %v661 = vmul.f32 %v643, %v649
        %v662 = vmul.f32 %v644, %v650
        %v663 = vmul.f32 %v645, %v651
        %v664 = vadd.f32 %v660, 1e-06
        %v665 = vadd.f32 %v661, 1e-06
        %v666 = vadd.f32 %v662, 1e-06
        %v667 = vadd.f32 %v663, 1e-06
        %v668 = vrcp.pop %v664
        %v669 = vmul.f32 %v656, %v668
        %v670 = vrcp.pop %v665
        %v671 = vmul.f32 %v657, %v670
        %v672 = vrcp.pop %v666
        %v673 = vmul.f32 %v658, %v672
        %v674 = vrcp.pop %v667
        %v675 = vmul.f32 %v659, %v674
        %v676 = vlog2.pop %v669
        %v677 = vmul.f32 %v676, 0.6931472
        %v678 = vlog2.pop %v671
        %v679 = vmul.f32 %v678, 0.6931472
        %v680 = vlog2.pop %v673
        %v681 = vmul.f32 %v680, 0.6931472
        %v682 = vlog2.pop %v675
        %v683 = vmul.f32 %v682, 0.6931472
        %v684 = vmul.f32 %v677, %v648
        %v685 = vmul.f32 %v679, %v649
        %v686 = vmul.f32 %v681, %v650
        %v687 = vmul.f32 %v683, %v651
        %v688 = vmul.f32 %v677, %v684
        %v689 = vmul.f32 %v679, %v685
        %v690 = vmul.f32 %v681, %v686
        %v691 = vmul.f32 %v683, %v687
        %v692 = vadd.f32 %v609, %v688
        %v693 = vadd.f32 %v610, %v689
        %v694 = vadd.f32 %v611, %v690
        %v695 = vadd.f32 %v612, %v691
        %v696 = vadd.f32 %v613, %v684
        %v697 = vadd.f32 %v614, %v685
        %v698 = vadd.f32 %v615, %v686
        %v699 = vadd.f32 %v616, %v687
        %vm700 = vcmp.gt.f32.partialorder %v648, 0.5
        %vm701 = vcmp.gt.f32.partialorder %v649, 0.5
        %vm702 = vcmp.gt.f32.partialorder %v650, 0.5
        %vm703 = vcmp.gt.f32.partialorder %v651, 0.5
        %v704 = vsel %vm700, 1, 0
        %v705 = vsel %vm701, 1, 0
        %v706 = vsel %vm702, 1, 0
        %v707 = vsel %vm703, 1, 0
        %v708 = vcvt.s32.f32 %v704
        %v709 = vcvt.s32.f32 %v705
        %v710 = vcvt.s32.f32 %v706
        %v711 = vcvt.s32.f32 %v707
        %v712 = vadd.f32 %v629, %v708
        %v713 = vadd.f32 %v630, %v709
        %v714 = vadd.f32 %v631, %v710
        %v715 = vadd.f32 %v632, %v711
        %v716 = vld [vmem:[%s347] sm:$0xff]
        %v717 = vld [vmem:[%s347 + $0x8] sm:$0xff]
        %v718 = vld [vmem:[%s347 + $0x10] sm:$0xff]
        %v719 = vld [vmem:[%s347 + $0x18] sm:$0xff]
        %v720 = vadd.f32 %v716, %v692
        %v721 = vadd.f32 %v717, %v693
        %v722 = vadd.f32 %v718, %v694
        %v723 = vadd.f32 %v719, %v695
        %724 = vst [vmem:[%s347] sm:$0xff] %v720
        %725 = vst [vmem:[%s347 + $0x8] sm:$0xff] %v721
        %726 = vst [vmem:[%s347 + $0x10] sm:$0xff] %v722
        %727 = vst [vmem:[%s347 + $0x18] sm:$0xff] %v723
        %v728 = vld [vmem:[%s354] sm:$0xff]
        %v729 = vld [vmem:[%s354 + $0x8] sm:$0xff]
        %v730 = vld [vmem:[%s354 + $0x10] sm:$0xff]
        %v731 = vld [vmem:[%s354 + $0x18] sm:$0xff]
        %v732 = vadd.f32 %v728, %v696
        %v733 = vadd.f32 %v729, %v697
        %v734 = vadd.f32 %v730, %v698
        %v735 = vadd.f32 %v731, %v699
        %736 = vst [vmem:[%s354] sm:$0xff] %v732
        %737 = vst [vmem:[%s354 + $0x8] sm:$0xff] %v733
        %738 = vst [vmem:[%s354 + $0x10] sm:$0xff] %v734
        %739 = vst [vmem:[%s354 + $0x18] sm:$0xff] %v735
        %v740 = vld [vmem:[%s361] sm:$0xff]
        %v741 = vld [vmem:[%s361 + $0x8] sm:$0xff]
        %v742 = vld [vmem:[%s361 + $0x10] sm:$0xff]
        %v743 = vld [vmem:[%s361 + $0x18] sm:$0xff]
        %v744 = vadd.f32 %v740, %v712
        %v745 = vadd.f32 %v741, %v713
        %v746 = vadd.f32 %v742, %v714
        %v747 = vadd.f32 %v743, %v715
        %748 = vst [vmem:[%s361] sm:$0xff] %v744
        %749 = vst [vmem:[%s361 + $0x8] sm:$0xff] %v745
        %750 = vst [vmem:[%s361 + $0x10] sm:$0xff] %v746
        %751 = vst [vmem:[%s361 + $0x18] sm:$0xff] %v747
        %s752 = sand.u32 %s133, 1
        %s753 = scalar_lea.sflag [#allocation4], %s752
        %s754 = sand.u32 %s133, 1
        %s755 = smul.addr %s754, 32
        %s756 = scalar_lea.vmem [#allocation8], %s755
        %s757 = sand.u32 %s29, 1
        %s758 = scalar_lea.sflag [#allocation10], %s757
        %s759 = sand.u32 %s159, 1
        %s760 = smul.addr %s759, 32
        %s761 = scalar_lea.vmem [#allocation9], %s760
        %s762 = sand.u32 %s29, 1
        %s763 = scalar_lea.sflag [#allocation10], %s762
        %s764 = sand.u32 %s185, 1
        %s765 = smul.addr %s764, 32
        %s766 = scalar_lea.vmem [#allocation11], %s765
        // Predicated region
        $region49: #{tpu_custom_call.1} parent=31 // pred_check
          %p767 = pneg %p143
        $region50: #{tpu_custom_call.1} parent=31 // pred_check_branch
          %769 = sbr.rel (%p767) target = $region52
        $region51: #{tpu_custom_call.1} parent=31 // pred_region
          %s771 = ssub.s32 512, 512
          %772 = vsyncadd %s753, %s771
          %s773 = smul.addr %s33, 4
          %s774 = smul.addr %s773, 128
          %s775 = scalar_lea.hbm %s3, %s774
          %s777 = sshll.u32 %s756, 4
          %s778 = int_to_ptr.vmem [resolvable:$true] %s777
          %780 = dma.vmem_to_hbm [thread:$0]  %s778, 512, %s775, %s753
        $region52: #{tpu_custom_call.1} parent=31 // pred_fallthru
          _
        // Predicated region
        $region53: #{tpu_custom_call.1} parent=31 // pred_check
          %p781 = pneg %p169
        $region54: #{tpu_custom_call.1} parent=31 // pred_check_branch
          %783 = sbr.rel (%p781) target = $region56
        $region55: #{tpu_custom_call.1} parent=31 // pred_region
          %s785 = ssub.s32 512, 512
          %786 = vsyncadd %s758, %s785
          %s787 = smul.addr %s33, 4
          %s788 = smul.addr %s787, 128
          %s789 = scalar_lea.hbm %s4, %s788
          %s791 = sshll.u32 %s761, 4
          %s792 = int_to_ptr.vmem [resolvable:$true] %s791
          %794 = dma.vmem_to_hbm [thread:$0]  %s792, 512, %s789, %s758
        $region56: #{tpu_custom_call.1} parent=31 // pred_fallthru
          _
        // Predicated region
        $region57: #{tpu_custom_call.1} parent=31 // pred_check
          %p795 = pneg %p195
        $region58: #{tpu_custom_call.1} parent=31 // pred_check_branch
          %797 = sbr.rel (%p795) target = $region60
        $region59: #{tpu_custom_call.1} parent=31 // pred_region
          %s799 = ssub.s32 512, 512
          %800 = vsyncadd %s763, %s799
          %s801 = smul.addr %s33, 4
          %s802 = smul.addr %s801, 128
          %s803 = scalar_lea.hbm %s5, %s802
          %s805 = sshll.u32 %s766, 4
          %s806 = int_to_ptr.vmem [resolvable:$true] %s805
          %808 = dma.vmem_to_hbm [thread:$0]  %s806, 512, %s803, %s763
        $region60: #{tpu_custom_call.1} parent=31 // pred_fallthru
          _
      $region32: #{tpu_custom_call.1} parent=5 // pred_fallthru
        _
      %p809 = scmp.le.s32.totalorder 2, %s24
      // Predicated region
      $region61: #{tpu_custom_call.1} parent=5 // pred_check
        %p810 = pneg %p809
      $region62: #{tpu_custom_call.1} parent=5 // pred_check_branch
        %812 = sbr.rel (%p810) target = $region64
      $region63: #{tpu_custom_call.1} parent=5 // pred_region
        %s813 = ssub.s32 %s24, 2
        // Predicated region
        $region65: #{tpu_custom_call.1} parent=63 // pred_check
          %p814 = pneg %p149
        $region66: #{tpu_custom_call.1} parent=63 // pred_check_branch
          %816 = sbr.rel (%p814) target = $region68
        $region67: #{tpu_custom_call.1} parent=63 // pred_region
          %s817 = sand.u32 %s134, 1
          %s818 = scalar_lea.sflag [#allocation4], %s817
          %s819 = sand.u32 %s134, 1
          %s820 = smul.addr %s819, 32
          %s821 = scalar_lea.vmem [#allocation8], %s820
          %822 = dma.done %s818, 512
        $region68: #{tpu_custom_call.1} parent=63 // pred_fallthru
          _
        // Predicated region
        $region69: #{tpu_custom_call.1} parent=63 // pred_check
          %p823 = pneg %p175
        $region70: #{tpu_custom_call.1} parent=63 // pred_check_branch
          %825 = sbr.rel (%p823) target = $region72
        $region71: #{tpu_custom_call.1} parent=63 // pred_region
          %s826 = sand.u32 %s30, 1
          %s827 = scalar_lea.sflag [#allocation10], %s826
          %s828 = sand.u32 %s160, 1
          %s829 = smul.addr %s828, 32
          %s830 = scalar_lea.vmem [#allocation9], %s829
          %831 = dma.done %s827, 512
        $region72: #{tpu_custom_call.1} parent=63 // pred_fallthru
          _
        // Predicated region
        $region73: #{tpu_custom_call.1} parent=63 // pred_check
          %p832 = pneg %p201
        $region74: #{tpu_custom_call.1} parent=63 // pred_check_branch
          %834 = sbr.rel (%p832) target = $region76
        $region75: #{tpu_custom_call.1} parent=63 // pred_region
          %s835 = sand.u32 %s30, 1
          %s836 = scalar_lea.sflag [#allocation10], %s835
          %s837 = sand.u32 %s186, 1
          %s838 = smul.addr %s837, 32
          %s839 = scalar_lea.vmem [#allocation11], %s838
          %840 = dma.done %s836, 512
        $region76: #{tpu_custom_call.1} parent=63 // pred_fallthru
          _
      $region64: #{tpu_custom_call.1} parent=5 // pred_fallthru
        _
    $region6: #{tpu_custom_call.1} parent=1 // loop_footer
      %s28 = sadd.s32 1, %s24
    $region7: #{tpu_custom_call.1} parent=1 // loop_footer_branch
      %23 = sbr.rel target = $region3
    $region8: #{tpu_custom_call.1} parent=1 // loop_exit
      _
    %841 = vsyncpa [#allocation3], 1
    %s842 = scalar_lea.sflag [#allocation3], 1
    %843 = vsyncpa %s842, 1
    %844 = vsyncpa [#allocation6], 1
    %s845 = scalar_lea.sflag [#allocation6], 1
    %846 = vsyncpa %s845, 1
    %847 = vsyncpa [#allocation4], 1
    %s848 = scalar_lea.sflag [#allocation4], 1
    %849 = vsyncpa %s848, 1
    %850 = vsyncpa [#allocation10], 1
    %s851 = scalar_lea.sflag [#allocation10], 1
    %852 = vsyncpa %s851, 1

</llo_original>
